<compile_context>
chip_gen: v7x
topology: tpu7x:2x2x1
jax: 0.10.0
libtpu: 0.0.40
codegen_flags: <defaults>
</compile_context>

<pallas_src>
import jax
import jax.numpy as jnp
from jax.experimental import pallas as pl
from jax.experimental.pallas import tpu as pltpu


def _normalize3_kernel(scale_ref, bias_ref,
                       x1_ref, x2_ref, x3_ref,
                       o1_ref, o2_ref, o3_ref):
    # scale/bias: (TR, 1) f32 -> broadcast across the lane dimension.
    s = scale_ref[...]
    b = bias_ref[...]
    # Static Python loop over the three tensors (unrolled at trace time);
    # each iteration is an independent load -> FMA -> store stream.
    for x_ref, o_ref in ((x1_ref, o1_ref), (x2_ref, o2_ref), (x3_ref, o3_ref)):
        x = x_ref[...].astype(jnp.float32)           # normalize in f32
        o_ref[...] = (x * s + b).astype(o_ref.dtype)


def _choose_tiles(R, L, itemsize, target_bytes=2 << 20):
    """Pick (TR, TL) for the flattened (R, L) view.

    Keeps the lane dim a multiple of 128 (or full extent) and targets roughly
    `target_bytes` per buffer so 12 double-buffered data buffers stay well
    inside VMEM on all TPU generations (including v7x's 64 MiB).
    """
    if L % 128 == 0:
        # Cap lane width so that at least 8 sublane rows fit in the target.
        max_cols = max(128, ((target_bytes // 8) // itemsize // 128) * 128)
        TL = min(L, max_cols)
    else:
        # Full extent is always legal; stores on the ragged edge are masked
        # but correctness is unaffected.
        TL = L

    rows_fit = max(1, target_bytes // max(1, TL * itemsize))
    if R <= rows_fit:
        TR = R                                      # full extent
    else:
        TR = min(R, max(8, (rows_fit // 8) * 8))    # multiple of 8 sublanes
    return TR, TL


def normalize_three(x1, x2, x3, mean, std):
    """Per-channel normalize three NCHW tensors with the same mean/std."""
    assert x1.shape == x2.shape == x3.shape
    assert x1.dtype == x2.dtype == x3.dtype
    N, C, H, W = x1.shape
    R, L = N * C, H * W
    itemsize = jnp.dtype(x1.dtype).itemsize

    mean_f = jnp.asarray(mean, jnp.float32).reshape(C)
    std_f = jnp.asarray(std, jnp.float32).reshape(C)
    inv_std = 1.0 / std_f
    # Per-row (row = n*C + c) scale/bias so blocks may span channel boundaries.
    scale = jnp.tile(inv_std, N).reshape(R, 1)            # (R, 1) f32
    bias = jnp.tile(-mean_f * inv_std, N).reshape(R, 1)   # (R, 1) f32

    # Lane-dense flattened views (free metadata reshape for contiguous NCHW).
    x1f = x1.reshape(R, L)
    x2f = x2.reshape(R, L)
    x3f = x3.reshape(R, L)

    TR, TL = _choose_tiles(R, L, itemsize)
    grid = (pl.cdiv(R, TR), pl.cdiv(L, TL))

    data_spec = pl.BlockSpec((TR, TL), lambda r, c: (r, c))
    vec_spec = pl.BlockSpec((TR, 1), lambda r, c: (r, 0))
    out_sds = jax.ShapeDtypeStruct((R, L), x1.dtype)

    # 3 inputs + 3 outputs, double-buffered => 12 data buffers, plus the tiny
    # scale/bias buffers and some headroom. Cap at 48 MiB (safe on v7x).
    blk_bytes = TR * TL * itemsize
    vmem_limit = int(min(48 << 20,
                         max(16 << 20, 12 * blk_bytes + 4 * TR * 4 + (4 << 20))))

    # Pure streaming op: tell XLA how many bytes it moves.
    cost = pl.CostEstimate(
        flops=6 * R * L,                      # mul + add per element, x3 tensors
        transcendentals=0,
        bytes_accessed=6 * R * L * itemsize + 2 * R * 4,
    )

    fn = pl.pallas_call(
        _normalize3_kernel,
        out_shape=(out_sds, out_sds, out_sds),
        grid=grid,
        in_specs=[vec_spec, vec_spec, data_spec, data_spec, data_spec],
        out_specs=(data_spec, data_spec, data_spec),
        compiler_params=pltpu.CompilerParams(
            dimension_semantics=("parallel", "parallel"),
            vmem_limit_bytes=vmem_limit),
        cost_estimate=cost,
    )
    o1f, o2f, o3f = fn(scale, bias, x1f, x2f, x3f)
    shape = (N, C, H, W)
    return o1f.reshape(shape), o2f.reshape(shape), o3f.reshape(shape)


if __name__ == "__main__":
    key = jax.random.PRNGKey(0)
    k1, k2, k3 = jax.random.split(key, 3)

    N, C, H, W = 2, 4, 16, 16
    x1 = jax.random.normal(k1, (N, C, H, W), dtype=jnp.float32)
    x2 = jax.random.normal(k2, (N, C, H, W), dtype=jnp.float32)
    x3 = jax.random.normal(k3, (N, C, H, W), dtype=jnp.float32)

    # The module's per-channel mean / std arguments.
    mean = jnp.array([0.1, 0.2, 0.3, 0.4], dtype=jnp.float32)
    std = jnp.array([0.5, 0.6, 0.7, 0.8], dtype=jnp.float32)

    o1, o2, o3 = normalize_three(x1, x2, x3, mean, std)
    jax.block_until_ready((o1, o2, o3))

    # Reference check in plain JAX (exact divide form).
    def ref(x):
        return (x - mean[None, :, None, None]) / std[None, :, None, None]

    assert jnp.allclose(o1, ref(x1), rtol=1e-5, atol=1e-5)
    assert jnp.allclose(o2, ref(x2), rtol=1e-5, atol=1e-5)
    assert jnp.allclose(o3, ref(x3), rtol=1e-5, atol=1e-5)

    print("KERNEL_OK")
</pallas_src>

<mosaic_0001>
module attributes {stable_mosaic.version = 11 : i64} {
  func.func @_normalize3_kernel(%arg0: i32, %arg1: i32, %arg2: memref<8x1xf32, #tpu.memory_space<vmem>>, %arg3: memref<8x1xf32, #tpu.memory_space<vmem>>, %arg4: memref<8x256xf32, #tpu.memory_space<vmem>>, %arg5: memref<8x256xf32, #tpu.memory_space<vmem>>, %arg6: memref<8x256xf32, #tpu.memory_space<vmem>>, %arg7: memref<8x256xf32, #tpu.memory_space<vmem>>, %arg8: memref<8x256xf32, #tpu.memory_space<vmem>>, %arg9: memref<8x256xf32, #tpu.memory_space<vmem>>) attributes {dimension_semantics = [#tpu.dimension_semantics<parallel>, #tpu.dimension_semantics<parallel>], iteration_bounds = array<i64: 1, 1>, scalar_prefetch = 0 : i64, scratch_operands = 0 : i64, tpu.core_type = #tpu.core_type<tc>, window_params = [{transform_indices = @transform_0, window_bounds = array<i64: 8, 1>}, {transform_indices = @transform_1, window_bounds = array<i64: 8, 1>}, {transform_indices = @transform_2, window_bounds = array<i64: 8, 256>}, {transform_indices = @transform_3, window_bounds = array<i64: 8, 256>}, {transform_indices = @transform_4, window_bounds = array<i64: 8, 256>}, {transform_indices = @transform_5, window_bounds = array<i64: 8, 256>}, {transform_indices = @transform_6, window_bounds = array<i64: 8, 256>}, {transform_indices = @transform_7, window_bounds = array<i64: 8, 256>}]} {
    %c0 = arith.constant 0 : index
    %c0_0 = arith.constant 0 : index
    %0 = vector.load %arg2[%c0, %c0_0] : memref<8x1xf32, #tpu.memory_space<vmem>>, vector<8x1xf32>
    %c0_1 = arith.constant 0 : index
    %c0_2 = arith.constant 0 : index
    %1 = vector.load %arg3[%c0_1, %c0_2] : memref<8x1xf32, #tpu.memory_space<vmem>>, vector<8x1xf32>
    %c0_3 = arith.constant 0 : index
    %c0_4 = arith.constant 0 : index
    %2 = vector.load %arg4[%c0_3, %c0_4] : memref<8x256xf32, #tpu.memory_space<vmem>>, vector<8x256xf32>
    %3 = vector.broadcast %0 : vector<8x1xf32> to vector<8x256xf32>
    %4 = arith.mulf %2, %3 : vector<8x256xf32>
    %5 = vector.broadcast %1 : vector<8x1xf32> to vector<8x256xf32>
    %6 = arith.addf %4, %5 : vector<8x256xf32>
    %c0_5 = arith.constant 0 : index
    %c0_6 = arith.constant 0 : index
    %7 = vector.load %arg7[%c0_5, %c0_6] : memref<8x256xf32, #tpu.memory_space<vmem>>, vector<8x256xf32>
    tpu.vector_store %arg7[%c0_5, %c0_6], %6 {strides = array<i32>} : memref<8x256xf32, #tpu.memory_space<vmem>>, vector<8x256xf32>,
    %c0_7 = arith.constant 0 : index
    %c0_8 = arith.constant 0 : index
    %8 = vector.load %arg5[%c0_7, %c0_8] : memref<8x256xf32, #tpu.memory_space<vmem>>, vector<8x256xf32>
    %9 = vector.broadcast %0 : vector<8x1xf32> to vector<8x256xf32>
    %10 = arith.mulf %8, %9 : vector<8x256xf32>
    %11 = vector.broadcast %1 : vector<8x1xf32> to vector<8x256xf32>
    %12 = arith.addf %10, %11 : vector<8x256xf32>
    %c0_9 = arith.constant 0 : index
    %c0_10 = arith.constant 0 : index
    %13 = vector.load %arg8[%c0_9, %c0_10] : memref<8x256xf32, #tpu.memory_space<vmem>>, vector<8x256xf32>
    tpu.vector_store %arg8[%c0_9, %c0_10], %12 {strides = array<i32>} : memref<8x256xf32, #tpu.memory_space<vmem>>, vector<8x256xf32>,
    %c0_11 = arith.constant 0 : index
    %c0_12 = arith.constant 0 : index
    %14 = vector.load %arg6[%c0_11, %c0_12] : memref<8x256xf32, #tpu.memory_space<vmem>>, vector<8x256xf32>
    %15 = vector.broadcast %0 : vector<8x1xf32> to vector<8x256xf32>
    %16 = arith.mulf %14, %15 : vector<8x256xf32>
    %17 = vector.broadcast %1 : vector<8x1xf32> to vector<8x256xf32>
    %18 = arith.addf %16, %17 : vector<8x256xf32>
    %c0_13 = arith.constant 0 : index
    %c0_14 = arith.constant 0 : index
    %19 = vector.load %arg9[%c0_13, %c0_14] : memref<8x256xf32, #tpu.memory_space<vmem>>, vector<8x256xf32>
    tpu.vector_store %arg9[%c0_13, %c0_14], %18 {strides = array<i32>} : memref<8x256xf32, #tpu.memory_space<vmem>>, vector<8x256xf32>,
    return
  }
  func.func @transform_0(%arg0: i32, %arg1: i32) -> (i32, i32) {
    %c0_i32 = arith.constant 0 : i32
    %c0_i32_0 = arith.constant 0 : i32
    return %arg0, %c0_i32 : i32, i32
  }
  func.func @transform_1(%arg0: i32, %arg1: i32) -> (i32, i32) {
    %c0_i32 = arith.constant 0 : i32
    %c0_i32_0 = arith.constant 0 : i32
    return %arg0, %c0_i32 : i32, i32
  }
  func.func @transform_2(%arg0: i32, %arg1: i32) -> (i32, i32) {
    %c0_i32 = arith.constant 0 : i32
    return %arg0, %arg1 : i32, i32
  }
  func.func @transform_3(%arg0: i32, %arg1: i32) -> (i32, i32) {
    %c0_i32 = arith.constant 0 : i32
    return %arg0, %arg1 : i32, i32
  }
  func.func @transform_4(%arg0: i32, %arg1: i32) -> (i32, i32) {
    %c0_i32 = arith.constant 0 : i32
    return %arg0, %arg1 : i32, i32
  }
  func.func @transform_5(%arg0: i32, %arg1: i32) -> (i32, i32) {
    %c0_i32 = arith.constant 0 : i32
    return %arg0, %arg1 : i32, i32
  }
  func.func @transform_6(%arg0: i32, %arg1: i32) -> (i32, i32) {
    %c0_i32 = arith.constant 0 : i32
    return %arg0, %arg1 : i32, i32
  }
  func.func @transform_7(%arg0: i32, %arg1: i32) -> (i32, i32) {
    %c0_i32 = arith.constant 0 : i32
    return %arg0, %arg1 : i32, i32
  }
}

</mosaic_0001>

<llo_original>
// kernel: tpu_custom_call.1
$region0: #{tpu_custom_call.1}
  #allocation0 [shape = 'u32[]', space=smem, size = 0x4, offset = 0x4, fixed_abs, tag = 'smem constant byte address 0x4 - core index']
  #allocation1 [shape = 'u32[144,128]{1,0:T(1,128)}', space=vmem, size = 0x12000, scoped, tag = 'internal scratch']
  %s0 = inlined_call_operand.vmem [shape: f32[8,1], index: 0, kind: input, shape index: {}]
  %s1 = inlined_call_operand.vmem [shape: f32[8,1], index: 1, kind: input, shape index: {}]
  %s2 = inlined_call_operand.vmem [shape: f32[8,256], index: 2, kind: input, shape index: {}]
  %s3 = inlined_call_operand.hbm [shape: f32[8,256], index: 3, kind: input, shape index: {}]
  %s4 = inlined_call_operand.vmem [shape: f32[8,256], index: 4, kind: input, shape index: {}]
  %s5 = inlined_call_operand.hbm [shape: f32[8,256], index: 5, kind: output, shape index: {0}]
  %s6 = inlined_call_operand.hbm [shape: f32[8,256], index: 6, kind: output, shape index: {1}]
  %s7 = inlined_call_operand.hbm [shape: f32[8,256], index: 7, kind: output, shape index: {2}]
  %8 = xla_tuple %s5, %s6, %s7
  %s9 = sld [smem:[#allocation0]]
  $region50: #{tpu_custom_call.1} parent=0
    _
  %s11 = ssub.s32 1, %s9
  %s12 = scalar_select 0, %s11, %s9
  $region1: #{tpu_custom_call.1} parent=0
    #allocation2 [shape = 'u8[8192]{0}', space=vmem, size = 0x2000, scoped, tag = 'input window, operand 3, single buffered']
    #allocation3 [shape = 's32[1]{0}', space=sflag, size = 0x4, scoped, tag = 'scoped memory for tpu_custom_call.1']
    #allocation4 [shape = 's32[1]{0}', space=sflag, size = 0x4, scoped, tag = 'scoped memory for tpu_custom_call.1']
    #allocation5 [shape = 'u8[8192]{0}', space=vmem, size = 0x2000, scoped, tag = 'output window, operand 0, single buffered']
    #allocation6 [shape = 'u8[8192]{0}', space=vmem, size = 0x2000, scoped, tag = 'output window, operand 1, single buffered']
    #allocation7 [shape = 's32[1]{0}', space=sflag, size = 0x4, scoped, tag = 'scoped memory for tpu_custom_call.1']
    #allocation8 [shape = 'u8[8192]{0}', space=vmem, size = 0x2000, scoped, tag = 'output window, operand 2, single buffered']
    %13 = vsyncpa [#allocation3], 0
    %14 = vsyncpa [#allocation4], 0
    %15 = vsyncpa [#allocation7], 0
    // Predicated region
    $region2: #{tpu_custom_call.1} parent=1 // pred_check
      _
    $region3: #{tpu_custom_call.1} parent=1 // pred_check_branch
      %17 = sbr.rel (0) target = $region5
    $region4: #{tpu_custom_call.1} parent=1 // pred_region
      _
    $region5: #{tpu_custom_call.1} parent=1 // pred_fallthru
      _
    // Predicated region
    $region6: #{tpu_custom_call.1} parent=1 // pred_check
      _
    $region7: #{tpu_custom_call.1} parent=1 // pred_check_branch
      %19 = sbr.rel (0) target = $region9
    $region8: #{tpu_custom_call.1} parent=1 // pred_region
      _
    $region9: #{tpu_custom_call.1} parent=1 // pred_fallthru
      _
    // Predicated region
    $region10: #{tpu_custom_call.1} parent=1 // pred_check
      _
    $region11: #{tpu_custom_call.1} parent=1 // pred_check_branch
      %21 = sbr.rel (0) target = $region13
    $region12: #{tpu_custom_call.1} parent=1 // pred_region
      _
    $region13: #{tpu_custom_call.1} parent=1 // pred_fallthru
      _
    // Predicated region
    $region14: #{tpu_custom_call.1} parent=1 // pred_check
      _
    $region15: #{tpu_custom_call.1} parent=1 // pred_check_branch
      %23 = sbr.rel (0) target = $region17
    $region16: #{tpu_custom_call.1} parent=1 // pred_region
      %s25 = ssub.s32 256, 256
      %26 = vsyncadd [#allocation3], %s25
      %s28 = sshll.u32 [#allocation2], 4
      %s29 = int_to_ptr.vmem [resolvable:$true] %s28
      %31 = dma.hbm_to_vmem [thread:$0]  %s3, 256, %s29, [#allocation3]
    $region17: #{tpu_custom_call.1} parent=1 // pred_fallthru
      _
    // Predicated region
    $region18: #{tpu_custom_call.1} parent=1 // pred_check
      _
    $region19: #{tpu_custom_call.1} parent=1 // pred_check_branch
      %33 = sbr.rel (0) target = $region21
    $region20: #{tpu_custom_call.1} parent=1 // pred_region
      _
    $region21: #{tpu_custom_call.1} parent=1 // pred_fallthru
      _
    // Predicated region
    $region22: #{tpu_custom_call.1} parent=1 // pred_check
      _
    $region23: #{tpu_custom_call.1} parent=1 // pred_check_branch
      %35 = sbr.rel (0) target = $region25
    $region24: #{tpu_custom_call.1} parent=1 // pred_region
      %36 = dma.done [#allocation3], 256
    $region25: #{tpu_custom_call.1} parent=1 // pred_fallthru
      _
    %v37 = vld [vmem:[%s0] sm:$0xff]
    %v38 = vld [vmem:[%s1] sm:$0xff]
    %v39 = vld [vmem:[%s2] sm:$0xff]
    %v40 = vld [vmem:[%s2 + $0x8] sm:$0xff]
    %42 = vset.pattern.permute.xlu0 0
    %43 = vperm.xlu0 %42, %v37
    %v44 = vpop.permute.xlu0 %43
    %v46 = vmul.f32 %v39, %v44
    %v47 = vmul.f32 %v40, %v44
    %49 = vset.pattern.permute.xlu0 0
    %50 = vperm.xlu0 %49, %v38
    %v51 = vpop.permute.xlu0 %50
    %v53 = vadd.f32 %v46, %v51
    %v54 = vadd.f32 %v47, %v51
    %55 = vst [vmem:[#allocation5] sm:$0xff] %v53
    %56 = vst [vmem:[#allocation5 + $0x8] sm:$0xff] %v54
    %v57 = vld [vmem:[#allocation2] sm:$0xff]
    %v58 = vld [vmem:[#allocation2 + $0x8] sm:$0xff]
    %v59 = vmul.f32 %v57, %v44
    %v60 = vmul.f32 %v58, %v44
    %v61 = vadd.f32 %v59, %v51
    %v62 = vadd.f32 %v60, %v51
    %63 = vst [vmem:[#allocation6] sm:$0xff] %v61
    %64 = vst [vmem:[#allocation6 + $0x8] sm:$0xff] %v62
    %v65 = vld [vmem:[%s4] sm:$0xff]
    %v66 = vld [vmem:[%s4 + $0x8] sm:$0xff]
    %v67 = vmul.f32 %v65, %v44
    %v68 = vmul.f32 %v66, %v44
    %v69 = vadd.f32 %v67, %v51
    %v70 = vadd.f32 %v68, %v51
    %71 = vst [vmem:[#allocation8] sm:$0xff] %v69
    %72 = vst [vmem:[#allocation8 + $0x8] sm:$0xff] %v70
    // Predicated region
    $region26: #{tpu_custom_call.1} parent=1 // pred_check
      _
    $region27: #{tpu_custom_call.1} parent=1 // pred_check_branch
      %74 = sbr.rel (0) target = $region29
    $region28: #{tpu_custom_call.1} parent=1 // pred_region
      %s76 = ssub.s32 256, 256
      %77 = vsyncadd [#allocation4], %s76
      %s79 = sshll.u32 [#allocation5], 4
      %s80 = int_to_ptr.vmem [resolvable:$true] %s79
      %82 = dma.vmem_to_hbm [thread:$0]  %s80, 256, %s5, [#allocation4]
    $region29: #{tpu_custom_call.1} parent=1 // pred_fallthru
      _
    // Predicated region
    $region30: #{tpu_custom_call.1} parent=1 // pred_check
      _
    $region31: #{tpu_custom_call.1} parent=1 // pred_check_branch
      %84 = sbr.rel (0) target = $region33
    $region32: #{tpu_custom_call.1} parent=1 // pred_region
      %s86 = ssub.s32 256, 256
      %87 = vsyncadd [#allocation7], %s86
      %s89 = sshll.u32 [#allocation6], 4
      %s90 = int_to_ptr.vmem [resolvable:$true] %s89
      %92 = dma.vmem_to_hbm [thread:$0]  %s90, 256, %s6, [#allocation7]
    $region33: #{tpu_custom_call.1} parent=1 // pred_fallthru
      _
    // Predicated region
    $region34: #{tpu_custom_call.1} parent=1 // pred_check
      _
    $region35: #{tpu_custom_call.1} parent=1 // pred_check_branch
      %94 = sbr.rel (0) target = $region37
    $region36: #{tpu_custom_call.1} parent=1 // pred_region
      %s96 = ssub.s32 256, 256
      %97 = vsyncadd [#allocation7], %s96
      %s99 = sshll.u32 [#allocation8], 4
      %s100 = int_to_ptr.vmem [resolvable:$true] %s99
      %102 = dma.vmem_to_hbm [thread:$0]  %s100, 256, %s7, [#allocation7]
    $region37: #{tpu_custom_call.1} parent=1 // pred_fallthru
      _
    // Predicated region
    $region38: #{tpu_custom_call.1} parent=1 // pred_check
      _
    $region39: #{tpu_custom_call.1} parent=1 // pred_check_branch
      %104 = sbr.rel (0) target = $region41
    $region40: #{tpu_custom_call.1} parent=1 // pred_region
      %105 = dma.done [#allocation4], 256
    $region41: #{tpu_custom_call.1} parent=1 // pred_fallthru
      _
    // Predicated region
    $region42: #{tpu_custom_call.1} parent=1 // pred_check
      _
    $region43: #{tpu_custom_call.1} parent=1 // pred_check_branch
      %107 = sbr.rel (0) target = $region45
    $region44: #{tpu_custom_call.1} parent=1 // pred_region
      %108 = dma.done [#allocation7], 256
    $region45: #{tpu_custom_call.1} parent=1 // pred_fallthru
      _
    // Predicated region
    $region46: #{tpu_custom_call.1} parent=1 // pred_check
      _
    $region47: #{tpu_custom_call.1} parent=1 // pred_check_branch
      %110 = sbr.rel (0) target = $region49
    $region48: #{tpu_custom_call.1} parent=1 // pred_region
      %111 = dma.done [#allocation7], 256
    $region49: #{tpu_custom_call.1} parent=1 // pred_fallthru
      _
    %112 = vsyncpa [#allocation3], 1
    %113 = vsyncpa [#allocation4], 1
    %114 = vsyncpa [#allocation7], 1

</llo_original>
